<compile_context>
chip_gen: v6e
topology: v6e:2x2x1
jax: 0.10.0
libtpu: 0.0.40
codegen_flags: <defaults>
</compile_context>

<pallas_src>
import jax
import jax.numpy as jnp
from jax import lax
from jax.experimental import pallas as pl
from jax.experimental.pallas import tpu as pltpu

EPS = 1e-5  # PyTorch BatchNorm2d default


def _round_up(x, m):
    return (x + m - 1) // m * m


def _make_fire_kernel(bn, w, hw, c2, s_ch):
    """bn images per grid step; w = image width; c2/s_ch output channel splits."""

    def kernel(x_ref, w1_ref, b1_ref, w2_ref, b2_ref,
               whl_ref, whc_ref, whr_ref, bh_ref,
               wdu_ref, wdc_ref, wdd_ref, bd_ref, o_ref):
        # Constant operands, hoisted once per grid step (outside the image loop).
        w1 = w1_ref[...]    # (S, Cin)   bn1 scale folded in
        b1 = b1_ref[...]    # (S, 1)
        w2 = w2_ref[...]    # (C2, S)    bn2 scale folded in
        b2 = b2_ref[...]    # (C2, 1)
        whl = whl_ref[...]  # (S, HW)    left tap  * left-boundary mask
        whc = whc_ref[...]  # (S, 1)     center tap
        whr = whr_ref[...]  # (S, HW)    right tap * right-boundary mask
        bh = bh_ref[...]    # (S, 1)
        wdu = wdu_ref[...]  # (S, HW)    up tap    * top-boundary mask
        wdc = wdc_ref[...]  # (S, 1)
        wdd = wdd_ref[...]  # (S, HW)    down tap  * bottom-boundary mask
        bd = bd_ref[...]    # (S, 1)

        def process(b):
            x = x_ref[b].astype(jnp.float32)            # (Cin, HW), lanes = HW

            # conv1 (1x1) + folded bn1 + relu -> squeeze activations (S, HW)
            sq = jnp.dot(w1, x, preferred_element_type=jnp.float32) + b1
            sq = jnp.maximum(sq, 0.0)

            # conv2 (1x1) expand branch (+ folded bn2 + relu) -> o[:, :C2]
            out1 = jnp.dot(w2, sq, preferred_element_type=jnp.float32) + b2
            o_ref[b, 0:c2, :] = jnp.maximum(out1, 0.0).astype(o_ref.dtype)

            # conv3_h: depthwise (1,3) along W, pad 1.  Neighbour taps via
            # lane roll; zero-pad boundary masks are pre-folded into whl/whr.
            h_out = (whl * pltpu.roll(sq, 1, axis=1)          # x[h, w-1]
                     + whc * sq
                     + whr * pltpu.roll(sq, hw - 1, axis=1)   # x[h, w+1]
                     + bh)
            o_ref[b, c2:c2 + s_ch, :] = jnp.maximum(h_out, 0.0).astype(o_ref.dtype)

            # conv3_d: depthwise (3,1) along H, pad 1 (roll by a full row).
            d_out = (wdu * pltpu.roll(sq, w, axis=1)          # x[h-1, w]
                     + wdc * sq
                     + wdd * pltpu.roll(sq, hw - w, axis=1)   # x[h+1, w]
                     + bd)
            o_ref[b, c2 + s_ch:c2 + 2 * s_ch, :] = \
                jnp.maximum(d_out, 0.0).astype(o_ref.dtype)

        if bn == 1:
            process(0)
        else:
            # fori_loop (not a static Python unroll) bounds per-image vreg
            # live ranges; a small unroll keeps LLO scheduler visibility.
            def body(b, carry):
                process(b)
                return carry

            lax.fori_loop(0, bn, body, None, unroll=min(bn, 2))

    return kernel


def _pick_batch_block(n, cin, cout, hw, block_budget_bytes=6 << 20, min_steps=2):
    """Images per grid step.

    Budget counts the VMEM footprint of one (in + out) block with 8-sublane
    padding (double-buffering is accounted for separately in vmem_limit).
    Steps are forced to >= 2 when n >= 2 so v7x can shard the 'parallel' grid
    axis across its 2 TensorCores, and balanced so padding waste stays small.
    """
    per_image = (_round_up(cin, 8) + _round_up(cout, 8)) * hw * 4
    bn_cap = max(1, block_budget_bytes // per_image)
    steps = max(min_steps, -(-n // bn_cap))
    steps = min(steps, n)
    bn = -(-n // steps)
    return int(bn), int(per_image)


@jax.jit
def fire_friendly_pallas(x_nchw, p):
    """x_nchw: (N, Cin, H, W) float32. Returns (N, 2*expand, H, W) float32."""
    x_nchw = x_nchw.astype(jnp.float32)
    n, cin, h, w = x_nchw.shape
    hw = h * w
    s_ch = p["w1"].shape[0]                 # squeeze planes
    c2 = p["w2"].shape[0]                   # 2*expand - 2*squeeze
    cout = c2 + 2 * s_ch

    # ---- fold BatchNorm (inference) into conv weights / biases (host-side) --
    sc1 = p["g1"] / jnp.sqrt(p["v1"] + EPS)                      # (S,)
    w1_k = p["w1"][:, :, 0, 0] * sc1[:, None]                    # (S, Cin)
    b1_k = (p["b1"] - p["m1"]) * sc1 + p["bt1"]                  # (S,)

    sc2 = p["g2"] / jnp.sqrt(p["v2"] + EPS)                      # (Cout,)
    sh2 = p["bt2"] - p["m2"] * sc2                               # (Cout,)
    sc2_1, sc2_h, sc2_d = sc2[:c2], sc2[c2:c2 + s_ch], sc2[c2 + s_ch:]
    sh2_1, sh2_h, sh2_d = sh2[:c2], sh2[c2:c2 + s_ch], sh2[c2 + s_ch:]

    w2_k = p["w2"][:, :, 0, 0] * sc2_1[:, None]                  # (C2, S)
    b2_k = p["b2"] * sc2_1 + sh2_1
    wh_k = p["wh"][:, 0, 0, :] * sc2_h[:, None]                  # (S, 3)
    bh_k = p["bh"] * sc2_h + sh2_h
    wd_k = p["wd"][:, 0, :, 0] * sc2_d[:, None]                  # (S, 3)
    bd_k = p["bd"] * sc2_d + sh2_d

    # Boundary-validity masks of the rolled depthwise taps, folded host-side
    # into the tap weights (removes 4 VPU multiplies + 4 sublane broadcasts
    # per image in the kernel).
    pos = jnp.arange(hw, dtype=jnp.int32)
    colw = pos % w
    m_left = (colw != 0).astype(jnp.float32)          # w-1 exists
    m_right = (colw != w - 1).astype(jnp.float32)     # w+1 exists
    m_up = (pos >= w).astype(jnp.float32)             # h-1 exists
    m_down = (pos < hw - w).astype(jnp.float32)       # h+1 exists

    f32 = lambda a: a.astype(jnp.float32)
    colv = lambda v: v.reshape(-1, 1).astype(jnp.float32)

    whl = f32(wh_k[:, 0:1]) * m_left[None, :]         # (S, HW)
    whc = colv(wh_k[:, 1])                            # (S, 1)
    whr = f32(wh_k[:, 2:3]) * m_right[None, :]        # (S, HW)
    wdu = f32(wd_k[:, 0:1]) * m_up[None, :]           # (S, HW)
    wdc = colv(wd_k[:, 1])                            # (S, 1)
    wdd = f32(wd_k[:, 2:3]) * m_down[None, :]         # (S, HW)

    const_args = (f32(w1_k), colv(b1_k), f32(w2_k), colv(b2_k),
                  whl, whc, whr, colv(bh_k),
                  wdu, wdc, wdd, colv(bd_k))

    # ---- channel-major slab: no NCHW<->NHWC transpose, just a reshape ------
    x3 = x_nchw.reshape(n, cin, hw)

    bn, per_image_bytes = _pick_batch_block(n, cin, cout, hw)
    steps = (n + bn - 1) // bn
    n_pad = steps * bn
    if n_pad != n:
        # Non-divisor batch: pad instead of degrading to tiny blocks; the
        # padded images' outputs are sliced away below.
        x3 = jnp.pad(x3, ((0, n_pad - n), (0, 0), (0, 0)))

    kernel = _make_fire_kernel(bn, w, hw, c2, s_ch)

    in_specs = [pl.BlockSpec((bn, cin, hw), lambda i: (i, 0, 0))]
    in_specs += [pl.BlockSpec(a.shape, lambda i: (0, 0)) for a in const_args]

    # Explicit VMEM budget: double-buffered (padded) in/out blocks + constants
    # + slack; scoped default is only 16 MiB on v5e.
    const_bytes = sum(2 * _round_up(a.shape[0], 8) * _round_up(a.shape[1], 128) * 4
                      for a in const_args)
    vmem_need = 2 * bn * per_image_bytes + const_bytes + (2 << 20)
    vmem_limit = int(min(max(vmem_need, 16 << 20), 96 << 20))

    out3 = pl.pallas_call(
        kernel,
        out_shape=jax.ShapeDtypeStruct((n_pad, cout, hw), jnp.float32),
        grid_spec=pltpu.PrefetchScalarGridSpec(
            num_scalar_prefetch=0,
            grid=(steps,),
            in_specs=in_specs,
            out_specs=pl.BlockSpec((bn, cout, hw), lambda i: (i, 0, 0)),
        ),
        compiler_params=pltpu.CompilerParams(
            dimension_semantics=("parallel",),
            vmem_limit_bytes=vmem_limit),
    )(x3, *const_args)

    return out3[:n].reshape(n, cout, h, w)


# -------------------------- pure-JAX reference -----------------------------
def fire_friendly_ref(x, p):
    def conv(x, w, b, pad, groups=1):
        y = lax.conv_general_dilated(
            x, w, (1, 1), pad,
            dimension_numbers=("NCHW", "OIHW", "NCHW"),
            feature_group_count=groups)
        return y + b[None, :, None, None]

    def bn(x, g, bta, m, v):
        return ((x - m[None, :, None, None])
                / jnp.sqrt(v + EPS)[None, :, None, None]
                * g[None, :, None, None] + bta[None, :, None, None])

    S = p["w1"].shape[0]
    s = jax.nn.relu(bn(conv(x, p["w1"], p["b1"], [(0, 0), (0, 0)]),
                       p["g1"], p["bt1"], p["m1"], p["v1"]))
    out1 = conv(s, p["w2"], p["b2"], [(0, 0), (0, 0)])
    h = conv(s, p["wh"], p["bh"], [(0, 0), (1, 1)], groups=S)
    d = conv(s, p["wd"], p["bd"], [(1, 1), (0, 0)], groups=S)
    out = jnp.concatenate([out1, h, d], axis=1)
    return jax.nn.relu(bn(out, p["g2"], p["bt2"], p["m2"], p["v2"]))


def init_params(key, inplanes, squeeze, expand):
    C2 = 2 * expand - 2 * squeeze
    C_out = 2 * expand
    ks = jax.random.split(key, 16)
    r = lambda k, shape, scale=0.2: scale * jax.random.normal(k, shape, jnp.float32)
    return dict(
        w1=r(ks[0], (squeeze, inplanes, 1, 1)), b1=r(ks[1], (squeeze,)),
        g1=1.0 + r(ks[2], (squeeze,), 0.1), bt1=r(ks[3], (squeeze,)),
        m1=r(ks[4], (squeeze,)), v1=0.5 + jnp.abs(r(ks[5], (squeeze,), 0.3)),
        w2=r(ks[6], (C2, squeeze, 1, 1)), b2=r(ks[7], (C2,)),
        wh=r(ks[8], (squeeze, 1, 1, 3)), bh=r(ks[9], (squeeze,)),
        wd=r(ks[10], (squeeze, 1, 3, 1)), bd=r(ks[11], (squeeze,)),
        g2=1.0 + r(ks[12], (C_out,), 0.1), bt2=r(ks[13], (C_out,)),
        m2=r(ks[14], (C_out,)), v2=0.5 + jnp.abs(r(ks[15], (C_out,), 0.3)),
    )


if __name__ == "__main__":
    key = jax.random.PRNGKey(0)
    kx, kx2, kp = jax.random.split(key, 3)

    N, inplanes, H, W = 2, 4, 16, 16
    squeeze_planes, expand_planes = 8, 16
    params = init_params(kp, inplanes, squeeze_planes, expand_planes)

    # Test 1: N=2 (bn=1 path, 2 grid steps).
    x = jax.random.normal(kx, (N, inplanes, H, W), jnp.float32)
    out = jax.block_until_ready(fire_friendly_pallas(x, params))
    ref = fire_friendly_ref(x, params)
    assert out.shape == (N, 2 * expand_planes, H, W)
    max_err = float(jnp.max(jnp.abs(out - ref)))
    assert jnp.allclose(out, ref, atol=2e-4, rtol=2e-4), max_err

    # Test 2: N=5 (non-divisor batch -> padding; bn>1 -> fori_loop path).
    x2 = jax.random.normal(kx2, (5, inplanes, H, W), jnp.float32)
    out2 = jax.block_until_ready(fire_friendly_pallas(x2, params))
    ref2 = fire_friendly_ref(x2, params)
    assert out2.shape == (5, 2 * expand_planes, H, W)
    max_err2 = float(jnp.max(jnp.abs(out2 - ref2)))
    assert jnp.allclose(out2, ref2, atol=2e-4, rtol=2e-4), max_err2

    print("KERNEL_OK")
</pallas_src>

<mosaic_0001>
module attributes {stable_mosaic.version = 11 : i64} {
  func.func @kernel(%arg0: i32, %arg1: memref<1x4x256xf32, #tpu.memory_space<vmem>>, %arg2: memref<8x4xf32, #tpu.memory_space<vmem>>, %arg3: memref<8x1xf32, #tpu.memory_space<vmem>>, %arg4: memref<16x8xf32, #tpu.memory_space<vmem>>, %arg5: memref<16x1xf32, #tpu.memory_space<vmem>>, %arg6: memref<8x256xf32, #tpu.memory_space<vmem>>, %arg7: memref<8x1xf32, #tpu.memory_space<vmem>>, %arg8: memref<8x256xf32, #tpu.memory_space<vmem>>, %arg9: memref<8x1xf32, #tpu.memory_space<vmem>>, %arg10: memref<8x256xf32, #tpu.memory_space<vmem>>, %arg11: memref<8x1xf32, #tpu.memory_space<vmem>>, %arg12: memref<8x256xf32, #tpu.memory_space<vmem>>, %arg13: memref<8x1xf32, #tpu.memory_space<vmem>>, %arg14: memref<1x32x256xf32, #tpu.memory_space<vmem>>) attributes {dimension_semantics = [#tpu.dimension_semantics<parallel>], iteration_bounds = array<i64: 2>, scalar_prefetch = 0 : i64, scratch_operands = 0 : i64, tpu.core_type = #tpu.core_type<tc>, window_params = [{transform_indices = @transform_0, window_bounds = array<i64: 1, 4, 256>}, {pipeline_mode = #tpu.pipeline_mode<synchronous>, transform_indices = @transform_1, window_bounds = array<i64: 8, 4>}, {pipeline_mode = #tpu.pipeline_mode<synchronous>, transform_indices = @transform_2, window_bounds = array<i64: 8, 1>}, {pipeline_mode = #tpu.pipeline_mode<synchronous>, transform_indices = @transform_3, window_bounds = array<i64: 16, 8>}, {pipeline_mode = #tpu.pipeline_mode<synchronous>, transform_indices = @transform_4, window_bounds = array<i64: 16, 1>}, {pipeline_mode = #tpu.pipeline_mode<synchronous>, transform_indices = @transform_5, window_bounds = array<i64: 8, 256>}, {pipeline_mode = #tpu.pipeline_mode<synchronous>, transform_indices = @transform_6, window_bounds = array<i64: 8, 1>}, {pipeline_mode = #tpu.pipeline_mode<synchronous>, transform_indices = @transform_7, window_bounds = array<i64: 8, 256>}, {pipeline_mode = #tpu.pipeline_mode<synchronous>, transform_indices = @transform_8, window_bounds = array<i64: 8, 1>}, {pipeline_mode = #tpu.pipeline_mode<synchronous>, transform_indices = @transform_9, window_bounds = array<i64: 8, 256>}, {pipeline_mode = #tpu.pipeline_mode<synchronous>, transform_indices = @transform_10, window_bounds = array<i64: 8, 1>}, {pipeline_mode = #tpu.pipeline_mode<synchronous>, transform_indices = @transform_11, window_bounds = array<i64: 8, 256>}, {pipeline_mode = #tpu.pipeline_mode<synchronous>, transform_indices = @transform_12, window_bounds = array<i64: 8, 1>}, {transform_indices = @transform_13, window_bounds = array<i64: 1, 32, 256>}]} {
    %c0 = arith.constant 0 : index
    %c0_0 = arith.constant 0 : index
    %0 = vector.load %arg2[%c0, %c0_0] : memref<8x4xf32, #tpu.memory_space<vmem>>, vector<8x4xf32>
    %c0_1 = arith.constant 0 : index
    %c0_2 = arith.constant 0 : index
    %1 = vector.load %arg3[%c0_1, %c0_2] : memref<8x1xf32, #tpu.memory_space<vmem>>, vector<8x1xf32>
    %c0_3 = arith.constant 0 : index
    %c0_4 = arith.constant 0 : index
    %2 = vector.load %arg4[%c0_3, %c0_4] : memref<16x8xf32, #tpu.memory_space<vmem>>, vector<16x8xf32>
    %c0_5 = arith.constant 0 : index
    %c0_6 = arith.constant 0 : index
    %3 = vector.load %arg5[%c0_5, %c0_6] : memref<16x1xf32, #tpu.memory_space<vmem>>, vector<16x1xf32>
    %c0_7 = arith.constant 0 : index
    %c0_8 = arith.constant 0 : index
    %4 = vector.load %arg6[%c0_7, %c0_8] : memref<8x256xf32, #tpu.memory_space<vmem>>, vector<8x256xf32>
    %c0_9 = arith.constant 0 : index
    %c0_10 = arith.constant 0 : index
    %5 = vector.load %arg7[%c0_9, %c0_10] : memref<8x1xf32, #tpu.memory_space<vmem>>, vector<8x1xf32>
    %c0_11 = arith.constant 0 : index
    %c0_12 = arith.constant 0 : index
    %6 = vector.load %arg8[%c0_11, %c0_12] : memref<8x256xf32, #tpu.memory_space<vmem>>, vector<8x256xf32>
    %c0_13 = arith.constant 0 : index
    %c0_14 = arith.constant 0 : index
    %7 = vector.load %arg9[%c0_13, %c0_14] : memref<8x1xf32, #tpu.memory_space<vmem>>, vector<8x1xf32>
    %c0_15 = arith.constant 0 : index
    %c0_16 = arith.constant 0 : index
    %8 = vector.load %arg10[%c0_15, %c0_16] : memref<8x256xf32, #tpu.memory_space<vmem>>, vector<8x256xf32>
    %c0_17 = arith.constant 0 : index
    %c0_18 = arith.constant 0 : index
    %9 = vector.load %arg11[%c0_17, %c0_18] : memref<8x1xf32, #tpu.memory_space<vmem>>, vector<8x1xf32>
    %c0_19 = arith.constant 0 : index
    %c0_20 = arith.constant 0 : index
    %10 = vector.load %arg12[%c0_19, %c0_20] : memref<8x256xf32, #tpu.memory_space<vmem>>, vector<8x256xf32>
    %c0_21 = arith.constant 0 : index
    %c0_22 = arith.constant 0 : index
    %11 = vector.load %arg13[%c0_21, %c0_22] : memref<8x1xf32, #tpu.memory_space<vmem>>, vector<8x1xf32>
    %c0_23 = arith.constant 0 : index
    %c0_24 = arith.constant 0 : index
    %c0_25 = arith.constant 0 : index
    %12 = vector.load %arg1[%c0_23, %c0_24, %c0_25] : memref<1x4x256xf32, #tpu.memory_space<vmem>>, vector<1x4x256xf32>
    %13 = vector.shape_cast %12 : vector<1x4x256xf32> to vector<4x256xf32>
    %cst = arith.constant dense<0.000000e+00> : vector<8x256xf32>
    %14 = tpu.matmul %0, %13, %cst {dimension_numbers = #tpu.dot_dimension_numbers<[1], [0], [0], [1], [0, 0, 1, 1], [], []>} : vector<8x4xf32>, vector<4x256xf32>, vector<8x256xf32> -> vector<8x256xf32>
    %15 = vector.broadcast %1 : vector<8x1xf32> to vector<8x256xf32>
    %16 = arith.addf %14, %15 : vector<8x256xf32>
    %cst_26 = arith.constant 0.000000e+00 : f32
    %17 = vector.broadcast %cst_26 : f32 to vector<8x256xf32>
    %18 = arith.maximumf %16, %17 : vector<8x256xf32>
    %cst_27 = arith.constant dense<0.000000e+00> : vector<16x256xf32>
    %19 = tpu.matmul %2, %18, %cst_27 {dimension_numbers = #tpu.dot_dimension_numbers<[1], [0], [0], [1], [0, 0, 1, 1], [], []>} : vector<16x8xf32>, vector<8x256xf32>, vector<16x256xf32> -> vector<16x256xf32>
    %20 = vector.broadcast %3 : vector<16x1xf32> to vector<16x256xf32>
    %21 = arith.addf %19, %20 : vector<16x256xf32>
    %cst_28 = arith.constant 0.000000e+00 : f32
    %22 = vector.broadcast %cst_28 : f32 to vector<16x256xf32>
    %23 = arith.maximumf %21, %22 : vector<16x256xf32>
    %c0_29 = arith.constant 0 : index
    %c0_30 = arith.constant 0 : index
    %c0_31 = arith.constant 0 : index
    %24 = vector.load %arg14[%c0_29, %c0_30, %c0_31] : memref<1x32x256xf32, #tpu.memory_space<vmem>>, vector<1x16x256xf32>
    %25 = vector.shape_cast %24 : vector<1x16x256xf32> to vector<16x256xf32>
    %26 = vector.shape_cast %23 : vector<16x256xf32> to vector<1x16x256xf32>
    tpu.vector_store %arg14[%c0_29, %c0_30, %c0_31], %26 {strides = array<i32>} : memref<1x32x256xf32, #tpu.memory_space<vmem>>, vector<1x16x256xf32>,
    %c1_i32 = arith.constant 1 : i32
    %27 = tpu.dynamic_rotate %18 by %c1_i32 dim 1 : vector<8x256xf32>, i32 -> vector<8x256xf32>
    %28 = arith.mulf %4, %27 : vector<8x256xf32>
    %29 = vector.broadcast %5 : vector<8x1xf32> to vector<8x256xf32>
    %30 = arith.mulf %29, %18 : vector<8x256xf32>
    %31 = arith.addf %28, %30 : vector<8x256xf32>
    %c255_i32 = arith.constant 255 : i32
    %32 = tpu.dynamic_rotate %18 by %c255_i32 dim 1 : vector<8x256xf32>, i32 -> vector<8x256xf32>
    %33 = arith.mulf %6, %32 : vector<8x256xf32>
    %34 = arith.addf %31, %33 : vector<8x256xf32>
    %35 = vector.broadcast %7 : vector<8x1xf32> to vector<8x256xf32>
    %36 = arith.addf %34, %35 : vector<8x256xf32>
    %cst_32 = arith.constant 0.000000e+00 : f32
    %37 = vector.broadcast %cst_32 : f32 to vector<8x256xf32>
    %38 = arith.maximumf %36, %37 : vector<8x256xf32>
    %c0_33 = arith.constant 0 : index
    %c16 = arith.constant 16 : index
    %c0_34 = arith.constant 0 : index
    %39 = vector.load %arg14[%c0_33, %c16, %c0_34] : memref<1x32x256xf32, #tpu.memory_space<vmem>>, vector<1x8x256xf32>
    %40 = vector.shape_cast %39 : vector<1x8x256xf32> to vector<8x256xf32>
    %41 = vector.shape_cast %38 : vector<8x256xf32> to vector<1x8x256xf32>
    tpu.vector_store %arg14[%c0_33, %c16, %c0_34], %41 {strides = array<i32>} : memref<1x32x256xf32, #tpu.memory_space<vmem>>, vector<1x8x256xf32>,
    %c16_i32 = arith.constant 16 : i32
    %42 = tpu.dynamic_rotate %18 by %c16_i32 dim 1 : vector<8x256xf32>, i32 -> vector<8x256xf32>
    %43 = arith.mulf %8, %42 : vector<8x256xf32>
    %44 = vector.broadcast %9 : vector<8x1xf32> to vector<8x256xf32>
    %45 = arith.mulf %44, %18 : vector<8x256xf32>
    %46 = arith.addf %43, %45 : vector<8x256xf32>
    %c240_i32 = arith.constant 240 : i32
    %47 = tpu.dynamic_rotate %18 by %c240_i32 dim 1 : vector<8x256xf32>, i32 -> vector<8x256xf32>
    %48 = arith.mulf %10, %47 : vector<8x256xf32>
    %49 = arith.addf %46, %48 : vector<8x256xf32>
    %50 = vector.broadcast %11 : vector<8x1xf32> to vector<8x256xf32>
    %51 = arith.addf %49, %50 : vector<8x256xf32>
    %cst_35 = arith.constant 0.000000e+00 : f32
    %52 = vector.broadcast %cst_35 : f32 to vector<8x256xf32>
    %53 = arith.maximumf %51, %52 : vector<8x256xf32>
    %c0_36 = arith.constant 0 : index
    %c24 = arith.constant 24 : index
    %c0_37 = arith.constant 0 : index
    %54 = vector.load %arg14[%c0_36, %c24, %c0_37] : memref<1x32x256xf32, #tpu.memory_space<vmem>>, vector<1x8x256xf32>
    %55 = vector.shape_cast %54 : vector<1x8x256xf32> to vector<8x256xf32>
    %56 = vector.shape_cast %53 : vector<8x256xf32> to vector<1x8x256xf32>
    tpu.vector_store %arg14[%c0_36, %c24, %c0_37], %56 {strides = array<i32>} : memref<1x32x256xf32, #tpu.memory_space<vmem>>, vector<1x8x256xf32>,
    return
  }
  func.func @transform_0(%arg0: i32) -> (i32, i32, i32) {
    %c0_i32 = arith.constant 0 : i32
    %c0_i32_0 = arith.constant 0 : i32
    %c0_i32_1 = arith.constant 0 : i32
    return %arg0, %c0_i32, %c0_i32_0 : i32, i32, i32
  }
  func.func @transform_1(%arg0: i32) -> (i32, i32) {
    %c0_i32 = arith.constant 0 : i32
    %c0_i32_0 = arith.constant 0 : i32
    %c0_i32_1 = arith.constant 0 : i32
    return %c0_i32, %c0_i32_0 : i32, i32
  }
  func.func @transform_2(%arg0: i32) -> (i32, i32) {
    %c0_i32 = arith.constant 0 : i32
    %c0_i32_0 = arith.constant 0 : i32
    %c0_i32_1 = arith.constant 0 : i32
    return %c0_i32, %c0_i32_0 : i32, i32
  }
  func.func @transform_3(%arg0: i32) -> (i32, i32) {
    %c0_i32 = arith.constant 0 : i32
    %c0_i32_0 = arith.constant 0 : i32
    %c0_i32_1 = arith.constant 0 : i32
    return %c0_i32, %c0_i32_0 : i32, i32
  }
  func.func @transform_4(%arg0: i32) -> (i32, i32) {
    %c0_i32 = arith.constant 0 : i32
    %c0_i32_0 = arith.constant 0 : i32
    %c0_i32_1 = arith.constant 0 : i32
    return %c0_i32, %c0_i32_0 : i32, i32
  }
  func.func @transform_5(%arg0: i32) -> (i32, i32) {
    %c0_i32 = arith.constant 0 : i32
    %c0_i32_0 = arith.constant 0 : i32
    %c0_i32_1 = arith.constant 0 : i32
    return %c0_i32, %c0_i32_0 : i32, i32
  }
  func.func @transform_6(%arg0: i32) -> (i32, i32) {
    %c0_i32 = arith.constant 0 : i32
    %c0_i32_0 = arith.constant 0 : i32
    %c0_i32_1 = arith.constant 0 : i32
    return %c0_i32, %c0_i32_0 : i32, i32
  }
  func.func @transform_7(%arg0: i32) -> (i32, i32) {
    %c0_i32 = arith.constant 0 : i32
    %c0_i32_0 = arith.constant 0 : i32
    %c0_i32_1 = arith.constant 0 : i32
    return %c0_i32, %c0_i32_0 : i32, i32
  }
  func.func @transform_8(%arg0: i32) -> (i32, i32) {
    %c0_i32 = arith.constant 0 : i32
    %c0_i32_0 = arith.constant 0 : i32
    %c0_i32_1 = arith.constant 0 : i32
    return %c0_i32, %c0_i32_0 : i32, i32
  }
  func.func @transform_9(%arg0: i32) -> (i32, i32) {
    %c0_i32 = arith.constant 0 : i32
    %c0_i32_0 = arith.constant 0 : i32
    %c0_i32_1 = arith.constant 0 : i32
    return %c0_i32, %c0_i32_0 : i32, i32
  }
  func.func @transform_10(%arg0: i32) -> (i32, i32) {
    %c0_i32 = arith.constant 0 : i32
    %c0_i32_0 = arith.constant 0 : i32
    %c0_i32_1 = arith.constant 0 : i32
    return %c0_i32, %c0_i32_0 : i32, i32
  }
  func.func @transform_11(%arg0: i32) -> (i32, i32) {
    %c0_i32 = arith.constant 0 : i32
    %c0_i32_0 = arith.constant 0 : i32
    %c0_i32_1 = arith.constant 0 : i32
    return %c0_i32, %c0_i32_0 : i32, i32
  }
  func.func @transform_12(%arg0: i32) -> (i32, i32) {
    %c0_i32 = arith.constant 0 : i32
    %c0_i32_0 = arith.constant 0 : i32
    %c0_i32_1 = arith.constant 0 : i32
    return %c0_i32, %c0_i32_0 : i32, i32
  }
  func.func @transform_13(%arg0: i32) -> (i32, i32, i32) {
    %c0_i32 = arith.constant 0 : i32
    %c0_i32_0 = arith.constant 0 : i32
    %c0_i32_1 = arith.constant 0 : i32
    return %arg0, %c0_i32, %c0_i32_0 : i32, i32, i32
  }
}

</mosaic_0001>

<llo_original>
// kernel: fire_friendly_pallas.1
$region0: #{fire_friendly_pallas.1}
  #allocation0 [shape = 'u32[]', space=smem, size = 0x4, offset = 0x4, fixed_abs, tag = 'smem constant byte address 0x4 - core index']
  #allocation1 [shape = 'u32[144,128]{1,0:T(1,128)}', space=vmem, size = 0x12000, scoped, tag = 'internal scratch']
  %s0 = inlined_call_operand.vmem [shape: f32[2,4,256], index: 0, kind: input, shape index: {}]
  %s1 = inlined_call_operand.vmem [shape: f32[8,4], index: 1, kind: input, shape index: {}]
  %s2 = inlined_call_operand.vmem [shape: f32[8,1], index: 2, kind: input, shape index: {}]
  %s3 = inlined_call_operand.vmem [shape: f32[16,8], index: 3, kind: input, shape index: {}]
  %s4 = inlined_call_operand.vmem [shape: f32[16,1], index: 4, kind: input, shape index: {}]
  %s5 = inlined_call_operand.vmem [shape: f32[8,256], index: 5, kind: input, shape index: {}]
  %s6 = inlined_call_operand.vmem [shape: f32[8,1], index: 6, kind: input, shape index: {}]
  %s7 = inlined_call_operand.vmem [shape: f32[8,256], index: 7, kind: input, shape index: {}]
  %s8 = inlined_call_operand.vmem [shape: f32[8,1], index: 8, kind: input, shape index: {}]
  %s9 = inlined_call_operand.vmem [shape: f32[8,256], index: 9, kind: input, shape index: {}]
  %s10 = inlined_call_operand.vmem [shape: f32[8,1], index: 10, kind: input, shape index: {}]
  %s11 = inlined_call_operand.vmem [shape: f32[8,256], index: 11, kind: input, shape index: {}]
  %s12 = inlined_call_operand.vmem [shape: f32[8,1], index: 12, kind: input, shape index: {}]
  %s13 = inlined_call_operand.vmem [shape: f32[2,32,256], index: 13, kind: output, shape index: {}]
  %s14 = sld [smem:[#allocation0]]
  $region85: #{fire_friendly_pallas.1} parent=0
    _
  %s16 = ssub.s32 1, %s14
  %s17 = scalar_select 0, %s16, %s14
  loop: start=0, step=1, limit=4
  $region2: #{fire_friendly_pallas.1} parent=0 // loop_pre_header
    _
  $region3: #{fire_friendly_pallas.1} parent=0 // loop_header
    %s19 = sphi 0, %s23
    %p20 = scmp.ge.s32.totalorder %s19, 4
    %s29 = sphi 0, %s31
    %s32 = sphi 0, %s29
    %s33 = sphi 0, %s32
    %s49 = sphi 0, %s33
    %s53 = sphi 0, %s53
    %s55 = sphi 0, %s53
    %s56 = sphi 0, %s55
    %s70 = sphi 0, %s56
    %s74 = sphi 0, %s74
    %s76 = sphi 0, %s74
    %s77 = sphi 0, %s76
    %s91 = sphi 0, %s77
    %s95 = sphi 0, %s95
    %s97 = sphi 0, %s95
    %s98 = sphi 0, %s97
    %s112 = sphi 0, %s98
    %s116 = sphi 0, %s116
    %s118 = sphi 0, %s116
    %s119 = sphi 0, %s118
    %s133 = sphi 0, %s119
    %s137 = sphi 0, %s137
    %s139 = sphi 0, %s137
    %s140 = sphi 0, %s139
    %s154 = sphi 0, %s140
    %s158 = sphi 0, %s158
    %s160 = sphi 0, %s158
    %s161 = sphi 0, %s160
    %s175 = sphi 0, %s161
    %s179 = sphi 0, %s179
    %s181 = sphi 0, %s179
    %s182 = sphi 0, %s181
    %s196 = sphi 0, %s182
    %s200 = sphi 0, %s200
    %s202 = sphi 0, %s200
    %s203 = sphi 0, %s202
    %s217 = sphi 0, %s203
    %s221 = sphi 0, %s221
    %s223 = sphi 0, %s221
    %s224 = sphi 0, %s223
    %s238 = sphi 0, %s224
    %s242 = sphi 0, %s242
    %s244 = sphi 0, %s242
    %s245 = sphi 0, %s244
    %s259 = sphi 0, %s245
    %s263 = sphi 0, %s263
    %s265 = sphi 0, %s263
    %s266 = sphi 0, %s265
    %s280 = sphi 0, %s266
    %s284 = sphi 0, %s284
    %s286 = sphi 0, %s284
    %s287 = sphi 0, %s286
    %s301 = sphi 0, %s287
    %s307 = sphi 0, %s309
    %s310 = sphi 0, %s307
    %s311 = sphi 0, %s310
    %s327 = sphi 0, %s311
  $region4: #{fire_friendly_pallas.1} parent=0 // loop_header_branch
    %22 = sbr.rel (%p20) target = $region8
  $region5: #{fire_friendly_pallas.1} parent=0 // loop_body
    %s24 = ssub.s32 %s19, 1
    %s25 = ssub.s32 %s19, 2
    %s26 = sadd.s32 %s19, 1
    %s27 = ssub.s32 %s19, %s26
    %p28 = scmp.eq.s32.totalorder %s27, 0
    %s30 = sadd.s32 %s29, 1
    %s31 = scalar_select %p28, %s29, %s30
    %p34 = pneg %p28
    %p35 = scmp.eq.s32.totalorder %s19, 1
    %p36 = por %p34, %p35
    %p37 = scmp.ne.s32.totalorder %s29, %s32
    %p38 = scmp.eq.s32.totalorder %s19, 0
    %p39 = por %p37, %p38
    %p40 = scmp.ne.s32.totalorder %s29, %s32
    %p41 = scmp.eq.s32.totalorder %s24, 1
    %p42 = por %p40, %p41
    %p43 = scmp.ne.s32.totalorder %s32, %s33
    %p44 = scmp.eq.s32.totalorder %s24, 0
    %p45 = por %p43, %p44
    %p46 = scmp.ne.s32.totalorder %s32, %s33
    %p47 = scmp.eq.s32.totalorder %s25, 1
    %p48 = por %p46, %p47
    %p50 = scmp.ne.s32.totalorder %s33, %s49
    %p51 = scmp.eq.s32.totalorder %s25, 0
    %p52 = por %p50, %p51
    %s54 = sadd.s32 %s53, 1
    %p57 = scmp.eq.s32.totalorder %s19, 1
    %p58 = scmp.ne.s32.totalorder %s53, %s55
    %p59 = scmp.eq.s32.totalorder %s19, 0
    %p60 = por %p58, %p59
    %p61 = scmp.ne.s32.totalorder %s53, %s55
    %p62 = scmp.eq.s32.totalorder %s24, 1
    %p63 = por %p61, %p62
    %p64 = scmp.ne.s32.totalorder %s55, %s56
    %p65 = scmp.eq.s32.totalorder %s24, 0
    %p66 = por %p64, %p65
    %p67 = scmp.ne.s32.totalorder %s55, %s56
    %p68 = scmp.eq.s32.totalorder %s25, 1
    %p69 = por %p67, %p68
    %p71 = scmp.ne.s32.totalorder %s56, %s70
    %p72 = scmp.eq.s32.totalorder %s25, 0
    %p73 = por %p71, %p72
    %s75 = sadd.s32 %s74, 1
    %p78 = scmp.eq.s32.totalorder %s19, 1
    %p79 = scmp.ne.s32.totalorder %s74, %s76
    %p80 = scmp.eq.s32.totalorder %s19, 0
    %p81 = por %p79, %p80
    %p82 = scmp.ne.s32.totalorder %s74, %s76
    %p83 = scmp.eq.s32.totalorder %s24, 1
    %p84 = por %p82, %p83
    %p85 = scmp.ne.s32.totalorder %s76, %s77
    %p86 = scmp.eq.s32.totalorder %s24, 0
    %p87 = por %p85, %p86
    %p88 = scmp.ne.s32.totalorder %s76, %s77
    %p89 = scmp.eq.s32.totalorder %s25, 1
    %p90 = por %p88, %p89
    %p92 = scmp.ne.s32.totalorder %s77, %s91
    %p93 = scmp.eq.s32.totalorder %s25, 0
    %p94 = por %p92, %p93
    %s96 = sadd.s32 %s95, 1
    %p99 = scmp.eq.s32.totalorder %s19, 1
    %p100 = scmp.ne.s32.totalorder %s95, %s97
    %p101 = scmp.eq.s32.totalorder %s19, 0
    %p102 = por %p100, %p101
    %p103 = scmp.ne.s32.totalorder %s95, %s97
    %p104 = scmp.eq.s32.totalorder %s24, 1
    %p105 = por %p103, %p104
    %p106 = scmp.ne.s32.totalorder %s97, %s98
    %p107 = scmp.eq.s32.totalorder %s24, 0
    %p108 = por %p106, %p107
    %p109 = scmp.ne.s32.totalorder %s97, %s98
    %p110 = scmp.eq.s32.totalorder %s25, 1
    %p111 = por %p109, %p110
    %p113 = scmp.ne.s32.totalorder %s98, %s112
    %p114 = scmp.eq.s32.totalorder %s25, 0
    %p115 = por %p113, %p114
    %s117 = sadd.s32 %s116, 1
    %p120 = scmp.eq.s32.totalorder %s19, 1
    %p121 = scmp.ne.s32.totalorder %s116, %s118
    %p122 = scmp.eq.s32.totalorder %s19, 0
    %p123 = por %p121, %p122
    %p124 = scmp.ne.s32.totalorder %s116, %s118
    %p125 = scmp.eq.s32.totalorder %s24, 1
    %p126 = por %p124, %p125
    %p127 = scmp.ne.s32.totalorder %s118, %s119
    %p128 = scmp.eq.s32.totalorder %s24, 0
    %p129 = por %p127, %p128
    %p130 = scmp.ne.s32.totalorder %s118, %s119
    %p131 = scmp.eq.s32.totalorder %s25, 1
    %p132 = por %p130, %p131
    %p134 = scmp.ne.s32.totalorder %s119, %s133
    %p135 = scmp.eq.s32.totalorder %s25, 0
    %p136 = por %p134, %p135
    %s138 = sadd.s32 %s137, 1
    %p141 = scmp.eq.s32.totalorder %s19, 1
    %p142 = scmp.ne.s32.totalorder %s137, %s139
    %p143 = scmp.eq.s32.totalorder %s19, 0
    %p144 = por %p142, %p143
    %p145 = scmp.ne.s32.totalorder %s137, %s139
    %p146 = scmp.eq.s32.totalorder %s24, 1
    %p147 = por %p145, %p146
    %p148 = scmp.ne.s32.totalorder %s139, %s140
    %p149 = scmp.eq.s32.totalorder %s24, 0
    %p150 = por %p148, %p149
    %p151 = scmp.ne.s32.totalorder %s139, %s140
    %p152 = scmp.eq.s32.totalorder %s25, 1
    %p153 = por %p151, %p152
    %p155 = scmp.ne.s32.totalorder %s140, %s154
    %p156 = scmp.eq.s32.totalorder %s25, 0
    %p157 = por %p155, %p156
    %s159 = sadd.s32 %s158, 1
    %p162 = scmp.eq.s32.totalorder %s19, 1
    %p163 = scmp.ne.s32.totalorder %s158, %s160
    %p164 = scmp.eq.s32.totalorder %s19, 0
    %p165 = por %p163, %p164
    %p166 = scmp.ne.s32.totalorder %s158, %s160
    %p167 = scmp.eq.s32.totalorder %s24, 1
    %p168 = por %p166, %p167
    %p169 = scmp.ne.s32.totalorder %s160, %s161
    %p170 = scmp.eq.s32.totalorder %s24, 0
    %p171 = por %p169, %p170
    %p172 = scmp.ne.s32.totalorder %s160, %s161
    %p173 = scmp.eq.s32.totalorder %s25, 1
    %p174 = por %p172, %p173
    %p176 = scmp.ne.s32.totalorder %s161, %s175
    %p177 = scmp.eq.s32.totalorder %s25, 0
    %p178 = por %p176, %p177
    %s180 = sadd.s32 %s179, 1
    %p183 = scmp.eq.s32.totalorder %s19, 1
    %p184 = scmp.ne.s32.totalorder %s179, %s181
    %p185 = scmp.eq.s32.totalorder %s19, 0
    %p186 = por %p184, %p185
    %p187 = scmp.ne.s32.totalorder %s179, %s181
    %p188 = scmp.eq.s32.totalorder %s24, 1
    %p189 = por %p187, %p188
    %p190 = scmp.ne.s32.totalorder %s181, %s182
    %p191 = scmp.eq.s32.totalorder %s24, 0
    %p192 = por %p190, %p191
    %p193 = scmp.ne.s32.totalorder %s181, %s182
    %p194 = scmp.eq.s32.totalorder %s25, 1
    %p195 = por %p193, %p194
    %p197 = scmp.ne.s32.totalorder %s182, %s196
    %p198 = scmp.eq.s32.totalorder %s25, 0
    %p199 = por %p197, %p198
    %s201 = sadd.s32 %s200, 1
    %p204 = scmp.eq.s32.totalorder %s19, 1
    %p205 = scmp.ne.s32.totalorder %s200, %s202
    %p206 = scmp.eq.s32.totalorder %s19, 0
    %p207 = por %p205, %p206
    %p208 = scmp.ne.s32.totalorder %s200, %s202
    %p209 = scmp.eq.s32.totalorder %s24, 1
    %p210 = por %p208, %p209
    %p211 = scmp.ne.s32.totalorder %s202, %s203
    %p212 = scmp.eq.s32.totalorder %s24, 0
    %p213 = por %p211, %p212
    %p214 = scmp.ne.s32.totalorder %s202, %s203
    %p215 = scmp.eq.s32.totalorder %s25, 1
    %p216 = por %p214, %p215
    %p218 = scmp.ne.s32.totalorder %s203, %s217
    %p219 = scmp.eq.s32.totalorder %s25, 0
    %p220 = por %p218, %p219
    %s222 = sadd.s32 %s221, 1
    %p225 = scmp.eq.s32.totalorder %s19, 1
    %p226 = scmp.ne.s32.totalorder %s221, %s223
    %p227 = scmp.eq.s32.totalorder %s19, 0
    %p228 = por %p226, %p227
    %p229 = scmp.ne.s32.totalorder %s221, %s223
    %p230 = scmp.eq.s32.totalorder %s24, 1
    %p231 = por %p229, %p230
    %p232 = scmp.ne.s32.totalorder %s223, %s224
    %p233 = scmp.eq.s32.totalorder %s24, 0
    %p234 = por %p232, %p233
    %p235 = scmp.ne.s32.totalorder %s223, %s224
    %p236 = scmp.eq.s32.totalorder %s25, 1
    %p237 = por %p235, %p236
    %p239 = scmp.ne.s32.totalorder %s224, %s238
    %p240 = scmp.eq.s32.totalorder %s25, 0
    %p241 = por %p239, %p240
    %s243 = sadd.s32 %s242, 1
    %p246 = scmp.eq.s32.totalorder %s19, 1
    %p247 = scmp.ne.s32.totalorder %s242, %s244
    %p248 = scmp.eq.s32.totalorder %s19, 0
    %p249 = por %p247, %p248
    %p250 = scmp.ne.s32.totalorder %s242, %s244
    %p251 = scmp.eq.s32.totalorder %s24, 1
    %p252 = por %p250, %p251
    %p253 = scmp.ne.s32.totalorder %s244, %s245
    %p254 = scmp.eq.s32.totalorder %s24, 0
    %p255 = por %p253, %p254
    %p256 = scmp.ne.s32.totalorder %s244, %s245
    %p257 = scmp.eq.s32.totalorder %s25, 1
    %p258 = por %p256, %p257
    %p260 = scmp.ne.s32.totalorder %s245, %s259
    %p261 = scmp.eq.s32.totalorder %s25, 0
    %p262 = por %p260, %p261
    %s264 = sadd.s32 %s263, 1
    %p267 = scmp.eq.s32.totalorder %s19, 1
    %p268 = scmp.ne.s32.totalorder %s263, %s265
    %p269 = scmp.eq.s32.totalorder %s19, 0
    %p270 = por %p268, %p269
    %p271 = scmp.ne.s32.totalorder %s263, %s265
    %p272 = scmp.eq.s32.totalorder %s24, 1
    %p273 = por %p271, %p272
    %p274 = scmp.ne.s32.totalorder %s265, %s266
    %p275 = scmp.eq.s32.totalorder %s24, 0
    %p276 = por %p274, %p275
    %p277 = scmp.ne.s32.totalorder %s265, %s266
    %p278 = scmp.eq.s32.totalorder %s25, 1
    %p279 = por %p277, %p278
    %p281 = scmp.ne.s32.totalorder %s266, %s280
    %p282 = scmp.eq.s32.totalorder %s25, 0
    %p283 = por %p281, %p282
    %s285 = sadd.s32 %s284, 1
    %p288 = scmp.eq.s32.totalorder %s19, 1
    %p289 = scmp.ne.s32.totalorder %s284, %s286
    %p290 = scmp.eq.s32.totalorder %s19, 0
    %p291 = por %p289, %p290
    %p292 = scmp.ne.s32.totalorder %s284, %s286
    %p293 = scmp.eq.s32.totalorder %s24, 1
    %p294 = por %p292, %p293
    %p295 = scmp.ne.s32.totalorder %s286, %s287
    %p296 = scmp.eq.s32.totalorder %s24, 0
    %p297 = por %p295, %p296
    %p298 = scmp.ne.s32.totalorder %s286, %s287
    %p299 = scmp.eq.s32.totalorder %s25, 1
    %p300 = por %p298, %p299
    %p302 = scmp.ne.s32.totalorder %s287, %s301
    %p303 = scmp.eq.s32.totalorder %s25, 0
    %p304 = por %p302, %p303
    %s305 = ssub.s32 %s19, %s26
    %p306 = scmp.eq.s32.totalorder %s305, 0
    %s308 = sadd.s32 %s307, 1
    %s309 = scalar_select %p306, %s307, %s308
    %p312 = pneg %p306
    %p313 = scmp.eq.s32.totalorder %s19, 1
    %p314 = por %p312, %p313
    %p315 = scmp.ne.s32.totalorder %s307, %s310
    %p316 = scmp.eq.s32.totalorder %s19, 0
    %p317 = por %p315, %p316
    %p318 = scmp.ne.s32.totalorder %s307, %s310
    %p319 = scmp.eq.s32.totalorder %s24, 1
    %p320 = por %p318, %p319
    %p321 = scmp.ne.s32.totalorder %s310, %s311
    %p322 = scmp.eq.s32.totalorder %s24, 0
    %p323 = por %p321, %p322
    %p324 = scmp.ne.s32.totalorder %s310, %s311
    %p325 = scmp.eq.s32.totalorder %s25, 1
    %p326 = por %p324, %p325
    %p328 = scmp.ne.s32.totalorder %s311, %s327
    %p329 = scmp.eq.s32.totalorder %s25, 0
    %p330 = por %p328, %p329
    %p331 = scmp.le.s32.totalorder 1, %s19
    %p332 = scmp.lt.s32.totalorder %s19, 3
    %p333 = pnand %p331, %p332
    %p334 = pneg %p333
    // Predicated region
    $region9: #{fire_friendly_pallas.1} parent=5 // pred_check
      _
    $region10: #{fire_friendly_pallas.1} parent=5 // pred_check_branch
      %336 = sbr.rel (%p333) target = $region12
    $region11: #{fire_friendly_pallas.1} parent=5 // pred_region
      %s337 = ssub.s32 %s19, 1
      // Predicated region
      $region13: #{fire_friendly_pallas.1} parent=11 // pred_check
        %p338 = pneg %p66
      $region14: #{fire_friendly_pallas.1} parent=11 // pred_check_branch
        %340 = sbr.rel (%p338) target = $region16
      $region15: #{fire_friendly_pallas.1} parent=11 // pred_region
        _
      $region16: #{fire_friendly_pallas.1} parent=11 // pred_fallthru
        _
      // Predicated region
      $region17: #{fire_friendly_pallas.1} parent=11 // pred_check
        %p341 = pneg %p87
      $region18: #{fire_friendly_pallas.1} parent=11 // pred_check_branch
        %343 = sbr.rel (%p341) target = $region20
      $region19: #{fire_friendly_pallas.1} parent=11 // pred_region
        _
      $region20: #{fire_friendly_pallas.1} parent=11 // pred_fallthru
        _
      // Predicated region
      $region21: #{fire_friendly_pallas.1} parent=11 // pred_check
        %p344 = pneg %p108
      $region22: #{fire_friendly_pallas.1} parent=11 // pred_check_branch
        %346 = sbr.rel (%p344) target = $region24
      $region23: #{fire_friendly_pallas.1} parent=11 // pred_region
        _
      $region24: #{fire_friendly_pallas.1} parent=11 // pred_fallthru
        _
      // Predicated region
      $region25: #{fire_friendly_pallas.1} parent=11 // pred_check
        %p347 = pneg %p129
      $region26: #{fire_friendly_pallas.1} parent=11 // pred_check_branch
        %349 = sbr.rel (%p347) target = $region28
      $region27: #{fire_friendly_pallas.1} parent=11 // pred_region
        _
      $region28: #{fire_friendly_pallas.1} parent=11 // pred_fallthru
        _
      // Predicated region
      $region29: #{fire_friendly_pallas.1} parent=11 // pred_check
        %p350 = pneg %p150
      $region30: #{fire_friendly_pallas.1} parent=11 // pred_check_branch
        %352 = sbr.rel (%p350) target = $region32
      $region31: #{fire_friendly_pallas.1} parent=11 // pred_region
        _
      $region32: #{fire_friendly_pallas.1} parent=11 // pred_fallthru
        _
      // Predicated region
      $region33: #{fire_friendly_pallas.1} parent=11 // pred_check
        %p353 = pneg %p171
      $region34: #{fire_friendly_pallas.1} parent=11 // pred_check_branch
        %355 = sbr.rel (%p353) target = $region36
      $region35: #{fire_friendly_pallas.1} parent=11 // pred_region
        _
      $region36: #{fire_friendly_pallas.1} parent=11 // pred_fallthru
        _
      // Predicated region
      $region37: #{fire_friendly_pallas.1} parent=11 // pred_check
        %p356 = pneg %p192
      $region38: #{fire_friendly_pallas.1} parent=11 // pred_check_branch
        %358 = sbr.rel (%p356) target = $region40
      $region39: #{fire_friendly_pallas.1} parent=11 // pred_region
        _
      $region40: #{fire_friendly_pallas.1} parent=11 // pred_fallthru
        _
      // Predicated region
      $region41: #{fire_friendly_pallas.1} parent=11 // pred_check
        %p359 = pneg %p213
      $region42: #{fire_friendly_pallas.1} parent=11 // pred_check_branch
        %361 = sbr.rel (%p359) target = $region44
      $region43: #{fire_friendly_pallas.1} parent=11 // pred_region
        _
      $region44: #{fire_friendly_pallas.1} parent=11 // pred_fallthru
        _
      // Predicated region
      $region45: #{fire_friendly_pallas.1} parent=11 // pred_check
        %p362 = pneg %p234
      $region46: #{fire_friendly_pallas.1} parent=11 // pred_check_branch
        %364 = sbr.rel (%p362) target = $region48
      $region47: #{fire_friendly_pallas.1} parent=11 // pred_region
        _
      $region48: #{fire_friendly_pallas.1} parent=11 // pred_fallthru
        _
      // Predicated region
      $region49: #{fire_friendly_pallas.1} parent=11 // pred_check
        %p365 = pneg %p255
      $region50: #{fire_friendly_pallas.1} parent=11 // pred_check_branch
        %367 = sbr.rel (%p365) target = $region52
      $region51: #{fire_friendly_pallas.1} parent=11 // pred_region
        _
      $region52: #{fire_friendly_pallas.1} parent=11 // pred_fallthru
        _
      // Predicated region
      $region53: #{fire_friendly_pallas.1} parent=11 // pred_check
        %p368 = pneg %p276
      $region54: #{fire_friendly_pallas.1} parent=11 // pred_check_branch
        %370 = sbr.rel (%p368) target = $region56
      $region55: #{fire_friendly_pallas.1} parent=11 // pred_region
        _
      $region56: #{fire_friendly_pallas.1} parent=11 // pred_fallthru
        _
      // Predicated region
      $region57: #{fire_friendly_pallas.1} parent=11 // pred_check
        %p371 = pneg %p297
      $region58: #{fire_friendly_pallas.1} parent=11 // pred_check_branch
        %373 = sbr.rel (%p371) target = $region60
      $region59: #{fire_friendly_pallas.1} parent=11 // pred_region
        _
      $region60: #{fire_friendly_pallas.1} parent=11 // pred_fallthru
        _
    $region12: #{fire_friendly_pallas.1} parent=5 // pred_fallthru
      _
    %p374 = scmp.lt.s32.totalorder %s19, 2
    // Predicated region
    $region61: #{fire_friendly_pallas.1} parent=5 // pred_check
      %p375 = pneg %p374
    $region62: #{fire_friendly_pallas.1} parent=5 // pred_check_branch
      %377 = sbr.rel (%p375) target = $region64
    $region63: #{fire_friendly_pallas.1} parent=5 // pred_region
      // Predicated region
      $region65: #{fire_friendly_pallas.1} parent=63 // pred_check
        %p378 = pneg %p39
      $region66: #{fire_friendly_pallas.1} parent=63 // pred_check_branch
        %380 = sbr.rel (%p378) target = $region68
      $region67: #{fire_friendly_pallas.1} parent=63 // pred_region
        %p381 = scmp.lt.s32.totalorder %s19, 1
        %s382 = scalar_select %p381, %s19, 1
        %s383 = smul.addr %s382, 2
        %s384 = smul.addr %s383, 4
        %s385 = scalar_lea.vmem %s0, %s384
      $region68: #{fire_friendly_pallas.1} parent=63 // pred_fallthru
        _
    $region64: #{fire_friendly_pallas.1} parent=5 // pred_fallthru
      _
    %p386 = scmp.le.s32.totalorder 1, %s19
    %p387 = scmp.lt.s32.totalorder %s19, 3
    %p388 = pnand %p386, %p387
    %p389 = pneg %p388
    // Predicated region
    $region69: #{fire_friendly_pallas.1} parent=5 // pred_check
      _
    $region70: #{fire_friendly_pallas.1} parent=5 // pred_check_branch
      %391 = sbr.rel (%p388) target = $region72
    $region71: #{fire_friendly_pallas.1} parent=5 // pred_region
      %s392 = ssub.s32 %s19, 1
      %p393 = scmp.lt.s32.totalorder %s24, 1
      %s394 = scalar_select %p393, %s24, 1
      %s395 = smul.addr %s394, 2
      %s396 = smul.addr %s395, 4
      %s397 = scalar_lea.vmem %s0, %s396
      %p398 = pneg %p45
      %p399 = pneg %p42
      %p400 = pneg %p66
      %p401 = pneg %p63
      %p402 = pneg %p87
      %p403 = pneg %p84
      %p404 = pneg %p108
      %p405 = pneg %p105
      %p406 = pneg %p129
      %p407 = pneg %p126
      %p408 = pneg %p150
      %p409 = pneg %p147
      %p410 = pneg %p171
      %p411 = pneg %p168
      %p412 = pneg %p192
      %p413 = pneg %p189
      %p414 = pneg %p213
      %p415 = pneg %p210
      %p416 = pneg %p234
      %p417 = pneg %p231
      %p418 = pneg %p255
      %p419 = pneg %p252
      %p420 = pneg %p276
      %p421 = pneg %p273
      %p422 = pneg %p297
      %p423 = pneg %p294
      %p424 = pneg %p323
      %p425 = pneg %p320
      %p426 = scmp.lt.s32.totalorder %s24, 1
      %s427 = scalar_select %p426, %s24, 1
      %s428 = smul.addr %s427, 8
      %s429 = smul.addr %s428, 8
      %s430 = scalar_lea.vmem %s13, %s429
      %p431 = scmp.lt.s32.totalorder %s24, 1
      %s432 = scalar_select %p431, %s24, 1
      %s433 = smul.addr %s432, 2
      %s434 = smul.addr %s433, 4
      %s435 = scalar_lea.vmem %s0, %s434
      %p436 = scmp.lt.s32.totalorder %s24, 1
      %s437 = scalar_select %p436, %s24, 1
      %s438 = smul.addr %s437, 8
      %s439 = smul.addr %s438, 8
      %s440 = scalar_lea.vmem %s13, %s439
      %v441 = vld [vmem:[%s1] sm:$0xff]
      %v442 = vld [vmem:[%s2] sm:$0xff]
      %v443 = vld [vmem:[%s3] sm:$0xff]
      %v444 = vld [vmem:[%s3 + $0x8] sm:$0xff]
      %v445 = vld [vmem:[%s4] sm:$0xff]
      %v446 = vld [vmem:[%s4 + $0x8] sm:$0xff]
      %v447 = vld [vmem:[%s5] sm:$0xff]
      %v448 = vld [vmem:[%s5 + $0x8] sm:$0xff]
      %v449 = vld [vmem:[%s6] sm:$0xff]
      %v450 = vld [vmem:[%s7] sm:$0xff]
      %v451 = vld [vmem:[%s7 + $0x8] sm:$0xff]
      %v452 = vld [vmem:[%s8] sm:$0xff]
      %v453 = vld [vmem:[%s9] sm:$0xff]
      %v454 = vld [vmem:[%s9 + $0x8] sm:$0xff]
      %v455 = vld [vmem:[%s10] sm:$0xff]
      %v456 = vld [vmem:[%s11] sm:$0xff]
      %v457 = vld [vmem:[%s11 + $0x8] sm:$0xff]
      %v458 = vld [vmem:[%s12] sm:$0xff]
      %v459 = vld [vmem:[%s435] sm:$0xff]
      %461 = vset.pattern.permute.xlu0 0
      %462 = vperm.xlu0 %461, %v442
      %v463 = vpop.permute.xlu0 %462
      %v466 = vcombine.high %v459, %v459
      %vm467 = vcmask 31744
      %v469 = vsel %vm467, %v441, 0
      %vm471 = vcmask 1043456
      %v472 = vsel %vm471, %v459, 0
      %v474 = vsel %vm471, %v466, 0
      %476 = vmatprep.subr.mxu0 0.0
      %477 = vmatpush1.msra.mxu0 0.0
      %478 = vmatprep.subr.mxu0 0.0
      %479 = vmatpush1.msra.mxu0 0.0
      %480 = vmatprep.subr.mxu0 0.0
      %481 = vmatpush1.msra.mxu0 0.0
      %482 = vmatprep.subr.mxu0 0.0
      %483 = vmatpush1.msra.mxu0 0.0
      %484 = vmatprep.subr.mxu0 0.0
      %485 = vmatpush1.msra.mxu0 0.0
      %486 = vmatprep.subr.mxu0 0.0
      %487 = vmatpush1.msra.mxu0 0.0
      %488 = vmatprep.subr.mxu0 0.0
      %489 = vmatpush1.msra.mxu0 0.0
      %490 = vmatprep.subr.mxu0 0.0
      %491 = vmatpush1.msra.mxu0 0.0
      %492 = vmatprep.subr.mxu0 0.0
      %493 = vmatpush1.msra.mxu0 0.0
      %494 = vmatprep.subr.mxu0 0.0
      %495 = vmatpush1.msra.mxu0 0.0
      %496 = vmatprep.subr.mxu0 0.0
      %497 = vmatpush1.msra.mxu0 0.0
      %498 = vmatprep.subr.mxu0 0.0
      %499 = vmatpush1.msra.mxu0 0.0
      %500 = vmatprep.subr.mxu0 0.0
      %501 = vmatpush1.msra.mxu0 0.0
      %502 = vmatprep.subr.mxu0 0.0
      %503 = vmatpush1.msra.mxu0 0.0
      %504 = vmatprep.subr.mxu0 0.0
      %505 = vmatpush1.msra.mxu0 0.0
      %506 = vmatprep.subr.mxu0 %v474
      %507 = vmatpush1.msra.mxu0 %v472
      %508 = vmatprep.subr.mxu0 0.0
      %509 = vmatpush2.msra.mxu0 0.0
      %510 = vmatprep.subr.mxu0 0.0
      %511 = vmatpush2.msra.mxu0 0.0
      %512 = vmatprep.subr.mxu0 0.0
      %513 = vmatpush2.msra.mxu0 0.0
      %514 = vmatprep.subr.mxu0 0.0
      %515 = vmatpush2.msra.mxu0 0.0
      %516 = vmatprep.subr.mxu0 0.0
      %517 = vmatpush2.msra.mxu0 0.0
      %518 = vmatprep.subr.mxu0 0.0
      %519 = vmatpush2.msra.mxu0 0.0
      %520 = vmatprep.subr.mxu0 0.0
      %521 = vmatpush2.msra.mxu0 0.0
      %522 = vmatprep.subr.mxu0 0.0
      %523 = vmatpush2.msra.mxu0 0.0
      %524 = vmatprep.subr.mxu0 0.0
      %525 = vmatpush2.msra.mxu0 0.0
      %526 = vmatprep.subr.mxu0 0.0
      %527 = vmatpush2.msra.mxu0 0.0
      %528 = vmatprep.subr.mxu0 0.0
      %529 = vmatpush2.msra.mxu0 0.0
      %530 = vmatprep.subr.mxu0 0.0
      %531 = vmatpush2.msra.mxu0 0.0
      %532 = vmatprep.subr.mxu0 0.0
      %533 = vmatpush2.msra.mxu0 0.0
      %534 = vmatprep.subr.mxu0 0.0
      %535 = vmatpush2.msra.mxu0 0.0
      %536 = vmatprep.subr.mxu0 0.0
      %537 = vmatpush2.msra.mxu0 0.0
      %538 = vmatprep.subr.mxu0 0.0
      %539 = vmatpush2.msra.mxu0 0.0
      %540 = vmatprep.mubr.f32.mxu0 0.0
      %541 = vmatmul.mubr.f32.gmra.mxu0 %v469
      %v542 = vpop.f32.mrf.mxu0
      %v543 = vadd.f32 %v463, %v542
      %v544 = vpop.f32.mrf.mxu0
      %v545 = vadd.f32 %v463, %v544
      %546 = vdwg.mxu0
      %v547 = vmax.f32 %v543, 0.0
      %v548 = vmax.f32 %v545, 0.0
      %550 = vset.pattern.permute.xlu0 0
      %551 = vperm.xlu0 %550, %v445
      %v552 = vpop.permute.xlu0 %551
      %555 = vset.pattern.permute.xlu0 0
      %556 = vperm.xlu0 %555, %v446
      %v557 = vpop.permute.xlu0 %556
      %vm559 = vcmask 64512
      %v561 = vsel %vm559, %v443, 0
      %v564 = vsel %vm559, %v444, 0
      %566 = vmatprep.subr.mxu0 0.0
      %567 = vmatpush1.msra.mxu0 0.0
      %568 = vmatprep.subr.mxu0 0.0
      %569 = vmatpush1.msra.mxu0 0.0
      %570 = vmatprep.subr.mxu0 0.0
      %571 = vmatpush1.msra.mxu0 0.0
      %572 = vmatprep.subr.mxu0 0.0
      %573 = vmatpush1.msra.mxu0 0.0
      %574 = vmatprep.subr.mxu0 0.0
      %575 = vmatpush1.msra.mxu0 0.0
      %576 = vmatprep.subr.mxu0 0.0
      %577 = vmatpush1.msra.mxu0 0.0
      %578 = vmatprep.subr.mxu0 0.0
      %579 = vmatpush1.msra.mxu0 0.0
      %580 = vmatprep.subr.mxu0 0.0
      %581 = vmatpush1.msra.mxu0 0.0
      %582 = vmatprep.subr.mxu0 0.0
      %583 = vmatpush1.msra.mxu0 0.0
      %584 = vmatprep.subr.mxu0 0.0
      %585 = vmatpush1.msra.mxu0 0.0
      %586 = vmatprep.subr.mxu0 0.0
      %587 = vmatpush1.msra.mxu0 0.0
      %588 = vmatprep.subr.mxu0 0.0
      %589 = vmatpush1.msra.mxu0 0.0
      %590 = vmatprep.subr.mxu0 0.0
      %591 = vmatpush1.msra.mxu0 0.0
      %592 = vmatprep.subr.mxu0 0.0
      %593 = vmatpush1.msra.mxu0 0.0
      %594 = vmatprep.subr.mxu0 0.0
      %595 = vmatpush1.msra.mxu0 0.0
      %596 = vmatprep.subr.mxu0 %v548
      %597 = vmatpush1.msra.mxu0 %v547
      %598 = vmatprep.subr.mxu0 0.0
      %599 = vmatpush2.msra.mxu0 0.0
      %600 = vmatprep.subr.mxu0 0.0
      %601 = vmatpush2.msra.mxu0 0.0
      %602 = vmatprep.subr.mxu0 0.0
      %603 = vmatpush2.msra.mxu0 0.0
      %604 = vmatprep.subr.mxu0 0.0
      %605 = vmatpush2.msra.mxu0 0.0
      %606 = vmatprep.subr.mxu0 0.0
      %607 = vmatpush2.msra.mxu0 0.0
      %608 = vmatprep.subr.mxu0 0.0
      %609 = vmatpush2.msra.mxu0 0.0
      %610 = vmatprep.subr.mxu0 0.0
      %611 = vmatpush2.msra.mxu0 0.0
      %612 = vmatprep.subr.mxu0 0.0
      %613 = vmatpush2.msra.mxu0 0.0
      %614 = vmatprep.subr.mxu0 0.0
      %615 = vmatpush2.msra.mxu0 0.0
      %616 = vmatprep.subr.mxu0 0.0
      %617 = vmatpush2.msra.mxu0 0.0
      %618 = vmatprep.subr.mxu0 0.0
      %619 = vmatpush2.msra.mxu0 0.0
      %620 = vmatprep.subr.mxu0 0.0
      %621 = vmatpush2.msra.mxu0 0.0
      %622 = vmatprep.subr.mxu0 0.0
      %623 = vmatpush2.msra.mxu0 0.0
      %624 = vmatprep.subr.mxu0 0.0
      %625 = vmatpush2.msra.mxu0 0.0
      %626 = vmatprep.subr.mxu0 0.0
      %627 = vmatpush2.msra.mxu0 0.0
      %628 = vmatprep.subr.mxu0 0.0
      %629 = vmatpush2.msra.mxu0 0.0
      %630 = vmatprep.mubr.f32.mxu0 0.0
      %631 = vmatmul.mubr.f32.gmra.mxu0 %v561
      %v632 = vpop.f32.mrf.mxu0
      %v633 = vadd.f32 %v552, %v632
      %v634 = vpop.f32.mrf.mxu0
      %v635 = vadd.f32 %v552, %v634
      %636 = vmatprep.mubr.f32.mxu0 0.0
      %637 = vmatmul.mubr.f32.gmra.mxu0 %v564
      %v638 = vpop.f32.mrf.mxu0
      %v639 = vadd.f32 %v557, %v638
      %v640 = vpop.f32.mrf.mxu0
      %v641 = vadd.f32 %v557, %v640
      %642 = vdwg.mxu0
      %v643 = vmax.f32 %v633, 0.0
      %v644 = vmax.f32 %v635, 0.0
      %v645 = vmax.f32 %v639, 0.0
      %v646 = vmax.f32 %v641, 0.0
      %647 = vst [vmem:[%s440] sm:$0xff] %v643
      %648 = vst [vmem:[%s440 + $0x8] sm:$0xff] %v644
      %649 = vst [vmem:[%s440 + $0x10] sm:$0xff] %v645
      %650 = vst [vmem:[%s440 + $0x18] sm:$0xff] %v646
      %651 = vrot.lane.b32.xlu0 %v547, 1
      %v652 = vpop.permute.xlu0 %651
      %653 = vrot.lane.b32.xlu0 %v548, 1
      %v654 = vpop.permute.xlu0 %653
      %v655 = vlaneseq
      %v656 = vand.u32 %v655, 127
      %vm657 = vcmp.lt.s32.totalorder %v656, 1
      %v658 = vsel %vm657, %v652, %v654
      %v659 = vsel %vm657, %v654, %v652
      %v660 = vmul.f32 %v447, %v659
      %v661 = vmul.f32 %v448, %v658
      %663 = vset.pattern.permute.xlu0 0
      %664 = vperm.xlu0 %663, %v449
      %v665 = vpop.permute.xlu0 %664
      %v667 = vmul.f32 %v665, %v547
      %v668 = vmul.f32 %v665, %v548
      %v669 = vadd.f32 %v660, %v667
      %v670 = vadd.f32 %v661, %v668
      %671 = vrot.lane.b32.xlu0 %v547, 127
      %v672 = vpop.permute.xlu0 %671
      %673 = vrot.lane.b32.xlu0 %v548, 127
      %v674 = vpop.permute.xlu0 %673
      %vm675 = vcmp.lt.s32.totalorder %v656, 127
      %v676 = vsel %vm675, %v672, %v674
      %v677 = vsel %vm675, %v674, %v672
      %v678 = vmul.f32 %v450, %v676
      %v679 = vmul.f32 %v451, %v677
      %v680 = vadd.f32 %v669, %v678
      %v681 = vadd.f32 %v670, %v679
      %683 = vset.pattern.permute.xlu0 0
      %684 = vperm.xlu0 %683, %v452
      %v685 = vpop.permute.xlu0 %684
      %v687 = vadd.f32 %v680, %v685
      %v688 = vadd.f32 %v681, %v685
      %v689 = vmax.f32 %v687, 0.0
      %v690 = vmax.f32 %v688, 0.0
      %691 = vst [vmem:[%s440 + $0x20] sm:$0xff] %v689
      %692 = vst [vmem:[%s440 + $0x28] sm:$0xff] %v690
      %693 = vrot.lane.b32.xlu0 %v547, 16
      %v694 = vpop.permute.xlu0 %693
      %695 = vrot.lane.b32.xlu0 %v548, 16
      %v696 = vpop.permute.xlu0 %695
      %vm697 = vcmp.lt.s32.totalorder %v656, 16
      %v698 = vsel %vm697, %v694, %v696
      %v699 = vsel %vm697, %v696, %v694
      %v700 = vmul.f32 %v453, %v699
      %v701 = vmul.f32 %v454, %v698
      %703 = vset.pattern.permute.xlu0 0
      %704 = vperm.xlu0 %703, %v455
      %v705 = vpop.permute.xlu0 %704
      %v707 = vmul.f32 %v705, %v547
      %v708 = vmul.f32 %v705, %v548
      %v709 = vadd.f32 %v700, %v707
      %v710 = vadd.f32 %v701, %v708
      %711 = vrot.lane.b32.xlu0 %v547, 112
      %v712 = vpop.permute.xlu0 %711
      %713 = vrot.lane.b32.xlu0 %v548, 112
      %v714 = vpop.permute.xlu0 %713
      %vm715 = vcmp.lt.s32.totalorder %v656, 112
      %v716 = vsel %vm715, %v712, %v714
      %v717 = vsel %vm715, %v714, %v712
      %v718 = vmul.f32 %v456, %v716
      %v719 = vmul.f32 %v457, %v717
      %v720 = vadd.f32 %v709, %v718
      %v721 = vadd.f32 %v710, %v719
      %723 = vset.pattern.permute.xlu0 0
      %724 = vperm.xlu0 %723, %v458
      %v725 = vpop.permute.xlu0 %724
      %v727 = vadd.f32 %v720, %v725
      %v728 = vadd.f32 %v721, %v725
      %v729 = vmax.f32 %v727, 0.0
      %v730 = vmax.f32 %v728, 0.0
      %731 = vst [vmem:[%s440 + $0x30] sm:$0xff] %v729
      %732 = vst [vmem:[%s440 + $0x38] sm:$0xff] %v730
      %p733 = scmp.lt.s32.totalorder %s24, 1
      %s734 = scalar_select %p733, %s24, 1
      %s735 = smul.addr %s734, 8
      %s736 = smul.addr %s735, 8
      %s737 = scalar_lea.vmem %s13, %s736
      // Predicated region
      $region73: #{fire_friendly_pallas.1} parent=71 // pred_check
        %p738 = pneg %p320
      $region74: #{fire_friendly_pallas.1} parent=71 // pred_check_branch
        %740 = sbr.rel (%p738) target = $region76
      $region75: #{fire_friendly_pallas.1} parent=71 // pred_region
        _
      $region76: #{fire_friendly_pallas.1} parent=71 // pred_fallthru
        _
    $region72: #{fire_friendly_pallas.1} parent=5 // pred_fallthru
      _
    %p741 = scmp.le.s32.totalorder 2, %s19
    // Predicated region
    $region77: #{fire_friendly_pallas.1} parent=5 // pred_check
      %p742 = pneg %p741
    $region78: #{fire_friendly_pallas.1} parent=5 // pred_check_branch
      %744 = sbr.rel (%p742) target = $region80
    $region79: #{fire_friendly_pallas.1} parent=5 // pred_region
      %s745 = ssub.s32 %s19, 2
      // Predicated region
      $region81: #{fire_friendly_pallas.1} parent=79 // pred_check
        %p746 = pneg %p326
      $region82: #{fire_friendly_pallas.1} parent=79 // pred_check_branch
        %748 = sbr.rel (%p746) target = $region84
      $region83: #{fire_friendly_pallas.1} parent=79 // pred_region
        %p749 = scmp.lt.s32.totalorder %s25, 1
        %s750 = scalar_select %p749, %s25, 1
        %s751 = smul.addr %s750, 8
        %s752 = smul.addr %s751, 8
        %s753 = scalar_lea.vmem %s13, %s752
      $region84: #{fire_friendly_pallas.1} parent=79 // pred_fallthru
        _
    $region80: #{fire_friendly_pallas.1} parent=5 // pred_fallthru
      _
  $region6: #{fire_friendly_pallas.1} parent=0 // loop_footer
    %s23 = sadd.s32 1, %s19
  $region7: #{fire_friendly_pallas.1} parent=0 // loop_footer_branch
    %18 = sbr.rel target = $region3
  $region8: #{fire_friendly_pallas.1} parent=0 // loop_exit
    _

</llo_original>
